<compile_context>
chip_gen: v6e
topology: v6e:2x2x1
jax: 0.10.0
libtpu: 0.0.40
codegen_flags: <defaults>
</compile_context>

<pallas_src>
import functools

import jax
import jax.numpy as jnp
from jax.experimental import pallas as pl
from jax.experimental.pallas import tpu as pltpu

EPS = 1e-5


def _extractor_kernel(counts_ref,                       # SMEM [B] int32 (scalar prefetch)
                      x_ref,                            # VMEM [E_pad, 2H] bf16
                      w1_ref, b1_ref, w2_ref, b2_ref,   # VMEM weights (w: bf16, b: f32)
                      w3t_ref, b3_ref,                  # VMEM [1,H] f32, [1,1] f32
                      out_ref):                         # VMEM [E_pad, 1] f32
    g = pl.program_id(0)
    n = counts_ref[g]                                   # edges in this graph (int32 scalar)
    e_pad = x_ref.shape[0]

    row_id = jax.lax.broadcasted_iota(jnp.int32, (e_pad, 1), 0)
    maskf = (row_id < n).astype(jnp.float32)            # [E_pad, 1] validity mask
    inv_n = 1.0 / jnp.maximum(n, 1).astype(jnp.float32)  # single scalar divide

    def instance_norm(h):
        # per-graph masked mean / biased variance over the edge (sublane) axis
        mean = jnp.sum(h * maskf, axis=0, keepdims=True) * inv_n                 # [1, C]
        centered = h - mean
        var = jnp.sum(centered * centered * maskf, axis=0, keepdims=True) * inv_n
        return centered * jax.lax.rsqrt(var + EPS)

    # layer 1: Linear (bf16 MXU, f32 acc) -> InstanceNorm -> ReLU (dropout = identity)
    h1 = jnp.dot(x_ref[...], w1_ref[...],
                 preferred_element_type=jnp.float32) + b1_ref[...]               # [E_pad, 4H]
    h1 = jnp.maximum(instance_norm(h1), 0.0) * maskf

    # layer 2
    h2 = jnp.dot(h1.astype(jnp.bfloat16), w2_ref[...],
                 preferred_element_type=jnp.float32) + b2_ref[...]               # [E_pad, H]
    h2 = jnp.maximum(instance_norm(h2), 0.0) * maskf

    # final Linear [H -> 1]: VPU multiply + lane reduction (skip N=1 MXU pass)
    logits = jnp.sum(h2 * w3t_ref[...], axis=-1, keepdims=True) + b3_ref[...]    # [E_pad, 1]
    out_ref[...] = logits * maskf


@functools.partial(jax.jit, static_argnames=("num_graphs", "edges_per_graph"))
def extractor_mlp_forward(emb, edge_index, batch, params, *,
                          num_graphs, edges_per_graph):
    """ExtractorMLP.forward(emb, edge_index, batch, type='primal'), learn_edge_att.

    `edges_per_graph` (static) must be >= the max number of edges of any graph.
    """
    col, row = edge_index[0], edge_index[1]
    e = col.shape[0]
    h = emb.shape[1]
    e_pad = edges_per_graph

    # ---- plain-JAX glue: gather node features, bucket edges per graph ----
    f12 = jnp.concatenate([emb[col], emb[row]], axis=-1).astype(jnp.bfloat16)    # [E, 2H]
    edge_batch = batch[col].astype(jnp.int32)                                    # [E]

    counts = jax.ops.segment_sum(jnp.ones((e,), jnp.int32), edge_batch,
                                 num_segments=num_graphs)                        # [B]
    order = jnp.argsort(edge_batch)
    starts = jnp.cumsum(counts) - counts                                         # [B]
    pos_sorted = jnp.arange(e, dtype=jnp.int32) - starts[edge_batch[order]]
    pos = jnp.zeros((e,), jnp.int32).at[order].set(pos_sorted)                   # slot within graph
    dest = edge_batch * e_pad + pos                                              # flat padded slot

    f12_pad = jnp.zeros((num_graphs * e_pad, 2 * h), jnp.bfloat16).at[dest].set(f12)
    f12_pad = f12_pad.reshape(num_graphs, e_pad, 2 * h)

    w1, b1, w2, b2, w3, b3 = params
    w1b, w2b = w1.astype(jnp.bfloat16), w2.astype(jnp.bfloat16)
    w3t = w3.astype(jnp.float32).T                                               # [1, H]
    b1f, b2f, b3f = (b1.astype(jnp.float32), b2.astype(jnp.float32),
                     b3.astype(jnp.float32))

    cost = pl.CostEstimate(
        flops=2 * num_graphs * e_pad * (2 * h * 4 * h + 4 * h * h + h),
        transcendentals=num_graphs * 5 * h,
        bytes_accessed=(f12_pad.size * 2 + num_graphs * e_pad * 4
                        + (w1.size + w2.size) * 2
                        + (b1.size + b2.size + w3.size + b3.size) * 4),
    )

    out_pad = pl.pallas_call(
        _extractor_kernel,
        out_shape=jax.ShapeDtypeStruct((num_graphs, e_pad, 1), jnp.float32),
        grid_spec=pltpu.PrefetchScalarGridSpec(
            num_scalar_prefetch=1,
            grid=(num_graphs,),
            in_specs=[
                pl.BlockSpec((None, e_pad, 2 * h), lambda g, cnt: (g, 0, 0)),    # f12 (per graph)
                pl.BlockSpec((2 * h, 4 * h), lambda g, cnt: (0, 0)),             # w1
                pl.BlockSpec((1, 4 * h), lambda g, cnt: (0, 0)),                 # b1
                pl.BlockSpec((4 * h, h), lambda g, cnt: (0, 0)),                 # w2
                pl.BlockSpec((1, h), lambda g, cnt: (0, 0)),                     # b2
                pl.BlockSpec((1, h), lambda g, cnt: (0, 0)),                     # w3^T
                pl.BlockSpec((1, 1), lambda g, cnt: (0, 0)),                     # b3
            ],
            out_specs=pl.BlockSpec((None, e_pad, 1), lambda g, cnt: (g, 0, 0)),
        ),
        compiler_params=pltpu.CompilerParams(dimension_semantics=("parallel",)),
        cost_estimate=cost,
    )(counts, f12_pad, w1b, b1f, w2b, b2f, w3t, b3f)

    att = out_pad.reshape(num_graphs * e_pad)[dest]
    return att[:, None]                                                          # [E, 1]


def _reference_forward(emb, edge_index, batch, params, num_graphs,
                       matmul_dtype=None):
    """Pure-JAX reference matching torch_geometric semantics.

    matmul_dtype=None          -> torch-faithful full-f32 path.
    matmul_dtype=jnp.bfloat16  -> mirrors the kernel's bf16 MXU operands.
    """
    col, row = edge_index[0], edge_index[1]
    f12 = jnp.concatenate([emb[col], emb[row]], axis=-1).astype(jnp.float32)
    eb = batch[col]
    counts = jnp.maximum(
        jax.ops.segment_sum(jnp.ones_like(eb, jnp.float32), eb, num_graphs), 1.0)

    def inorm(x):
        mean = jax.ops.segment_sum(x, eb, num_graphs) / counts[:, None]
        c = x - mean[eb]
        var = jax.ops.segment_sum(c * c, eb, num_graphs) / counts[:, None]
        return c * jax.lax.rsqrt(var[eb] + EPS)

    def mm(a, w):
        if matmul_dtype is not None:
            a = a.astype(matmul_dtype)
            w = w.astype(matmul_dtype)
        return jnp.dot(a, w, preferred_element_type=jnp.float32)

    w1, b1, w2, b2, w3, b3 = params
    x = jnp.maximum(inorm(mm(f12, w1) + b1), 0.0)
    x = jnp.maximum(inorm(mm(x, w2) + b2), 0.0)
    return jnp.dot(x, w3, preferred_element_type=jnp.float32) + b3


def init_params(key, hidden_size):
    """MLP([2H, 4H, H, 1]) parameters, deterministic synthetic init."""
    dims = [2 * hidden_size, 4 * hidden_size, hidden_size, 1]
    keys = jax.random.split(key, 6)
    params = []
    for i in range(3):
        fan_in = dims[i]
        bound = 1.0 / jnp.sqrt(jnp.float32(fan_in))
        w = jax.random.uniform(keys[2 * i], (dims[i], dims[i + 1]),
                               jnp.float32, -bound, bound)
        b = jax.random.uniform(keys[2 * i + 1], (1, dims[i + 1]),
                               jnp.float32, -bound, bound)
        params += [w, b]
    return tuple(params)


if __name__ == "__main__":
    key = jax.random.PRNGKey(0)
    k_emb, k_edge, k_param = jax.random.split(key, 3)

    hidden_size = 16
    num_nodes = 12
    num_edges = 32
    num_graphs = 2

    emb = jax.random.normal(k_emb, (num_nodes, hidden_size), jnp.float32)
    edge_index = jax.random.randint(k_edge, (2, num_edges), 0, num_nodes,
                                    dtype=jnp.int32)
    # nodes 0..5 -> graph 0, nodes 6..11 -> graph 1
    batch = (jnp.arange(num_nodes, dtype=jnp.int32) >= num_nodes // 2).astype(jnp.int32)

    params = init_params(k_param, hidden_size)

    # static per-graph padding: >= max edges of any graph, rounded up to 8 sublanes
    edge_batch = batch[edge_index[0]]
    max_edges = int(jnp.max(jnp.bincount(edge_batch, length=num_graphs)))
    edges_per_graph = max(8, -(-max_edges // 8) * 8)

    out = extractor_mlp_forward(emb, edge_index, batch, params,
                                num_graphs=num_graphs,
                                edges_per_graph=edges_per_graph)
    out = jax.block_until_ready(out)
    assert out.shape == (num_edges, 1)

    # tight check against a reference that mirrors the kernel's bf16 MXU operands
    ref_bf16 = _reference_forward(emb, edge_index, batch, params, num_graphs,
                                  matmul_dtype=jnp.bfloat16)
    # loose check against the torch-faithful full-f32 reference
    ref_f32 = _reference_forward(emb, edge_index, batch, params, num_graphs)

    assert jnp.allclose(out, ref_bf16, atol=1e-3, rtol=1e-3), \
        float(jnp.max(jnp.abs(out - ref_bf16)))
    assert jnp.allclose(out, ref_f32, atol=5e-2, rtol=5e-2), \
        float(jnp.max(jnp.abs(out - ref_f32)))

    print("KERNEL_OK")
</pallas_src>

<mosaic_0001>
module attributes {stable_mosaic.version = 11 : i64} {
  func.func private @main(%arg0: i32) attributes {dimension_semantics = [#tpu.dimension_semantics<core_parallel>], iteration_bounds = array<i64: 2>, tpu.core_type = #tpu.core_type<sc_scalar_subcore>, window_params = []} {
    return
  }
}

module attributes {stable_mosaic.version = 11 : i64} {
  func.func private @main(%arg0: i32) attributes {dimension_semantics = [#tpu.dimension_semantics<core_parallel>], iteration_bounds = array<i64: 2>, tpu.core_type = #tpu.core_type<sc_scalar_subcore>, window_params = []} {
    return
  }
}

module attributes {stable_mosaic.version = 11 : i64} {
  func.func @_extractor_kernel(%arg0: i32, %arg1: memref<2xi32, #tpu.memory_space<smem>>, %arg2: memref<1x24x32xbf16, #tpu.memory_space<vmem>>, %arg3: memref<32x64xbf16, #tpu.memory_space<vmem>>, %arg4: memref<1x64xf32, #tpu.memory_space<vmem>>, %arg5: memref<64x16xbf16, #tpu.memory_space<vmem>>, %arg6: memref<1x16xf32, #tpu.memory_space<vmem>>, %arg7: memref<1x16xf32, #tpu.memory_space<vmem>>, %arg8: memref<1x1xf32, #tpu.memory_space<vmem>>, %arg9: memref<1x24x1xf32, #tpu.memory_space<vmem>>) attributes {dimension_semantics = [#tpu.dimension_semantics<parallel>], iteration_bounds = array<i64: 2>, scalar_prefetch = 1 : i64, scratch_operands = 0 : i64, tpu.core_type = #tpu.core_type<tc>, window_params = [{transform_indices = @transform_0, window_bounds = array<i64: 1, 24, 32>}, {pipeline_mode = #tpu.pipeline_mode<synchronous>, transform_indices = @transform_1, window_bounds = array<i64: 32, 64>}, {pipeline_mode = #tpu.pipeline_mode<synchronous>, transform_indices = @transform_2, window_bounds = array<i64: 1, 64>}, {pipeline_mode = #tpu.pipeline_mode<synchronous>, transform_indices = @transform_3, window_bounds = array<i64: 64, 16>}, {pipeline_mode = #tpu.pipeline_mode<synchronous>, transform_indices = @transform_4, window_bounds = array<i64: 1, 16>}, {pipeline_mode = #tpu.pipeline_mode<synchronous>, transform_indices = @transform_5, window_bounds = array<i64: 1, 16>}, {pipeline_mode = #tpu.pipeline_mode<synchronous>, transform_indices = @transform_6, window_bounds = array<i64: 1, 1>}, {transform_indices = @transform_7, window_bounds = array<i64: 1, 24, 1>}]} {
    %0 = arith.index_cast %arg0 : i32 to index
    %1 = memref.load %arg1[%0] : memref<2xi32, #tpu.memory_space<smem>>
    %2 = tpu.iota {dimensions = array<i32: 0>} : vector<24x1xi32>
    %3 = vector.broadcast %1 : i32 to vector<24x1xi32>
    %4 = arith.cmpi slt, %2, %3 : vector<24x1xi32>
    %5 = arith.extui %4 : vector<24x1xi1> to vector<24x1xi32>
    %6 = arith.sitofp %5 : vector<24x1xi32> to vector<24x1xf32>
    %c1_i32 = arith.constant 1 : i32
    %7 = arith.maxsi %1, %c1_i32 : i32
    %8 = arith.sitofp %7 : i32 to f32
    %cst = arith.constant 1.000000e+00 : f32
    %9 = arith.divf %cst, %8 : f32
    %c0 = arith.constant 0 : index
    %c0_0 = arith.constant 0 : index
    %c0_1 = arith.constant 0 : index
    %10 = vector.load %arg2[%c0, %c0_0, %c0_1] : memref<1x24x32xbf16, #tpu.memory_space<vmem>>, vector<1x24x32xbf16>
    %11 = vector.shape_cast %10 : vector<1x24x32xbf16> to vector<24x32xbf16>
    %c0_2 = arith.constant 0 : index
    %c0_3 = arith.constant 0 : index
    %12 = vector.load %arg3[%c0_2, %c0_3] : memref<32x64xbf16, #tpu.memory_space<vmem>>, vector<32x64xbf16>
    %cst_4 = arith.constant dense<0.000000e+00> : vector<24x64xf32>
    %13 = tpu.matmul %11, %12, %cst_4 {dimension_numbers = #tpu.dot_dimension_numbers<[1], [0], [0], [1], [0, 0, 1, 1], [], []>} : vector<24x32xbf16>, vector<32x64xbf16>, vector<24x64xf32> -> vector<24x64xf32>
    %c0_5 = arith.constant 0 : index
    %c0_6 = arith.constant 0 : index
    %14 = vector.load %arg4[%c0_5, %c0_6] : memref<1x64xf32, #tpu.memory_space<vmem>>, vector<1x64xf32>
    %15 = vector.broadcast %14 : vector<1x64xf32> to vector<24x64xf32>
    %16 = arith.addf %13, %15 : vector<24x64xf32>
    %17 = vector.broadcast %6 : vector<24x1xf32> to vector<24x64xf32>
    %18 = arith.mulf %16, %17 : vector<24x64xf32>
    %cst_7 = arith.constant dense<0.000000e+00> : vector<64xf32>
    %19 = vector.multi_reduction <add>, %18, %cst_7 [0] : vector<24x64xf32> to vector<64xf32>
    %20 = vector.shape_cast %19 : vector<64xf32> to vector<1x64xf32>
    %21 = vector.broadcast %9 : f32 to vector<1x64xf32>
    %22 = arith.mulf %20, %21 : vector<1x64xf32>
    %23 = vector.broadcast %22 : vector<1x64xf32> to vector<24x64xf32>
    %24 = arith.subf %16, %23 : vector<24x64xf32>
    %25 = arith.mulf %24, %24 : vector<24x64xf32>
    %26 = vector.broadcast %6 : vector<24x1xf32> to vector<24x64xf32>
    %27 = arith.mulf %25, %26 : vector<24x64xf32>
    %cst_8 = arith.constant dense<0.000000e+00> : vector<64xf32>
    %28 = vector.multi_reduction <add>, %27, %cst_8 [0] : vector<24x64xf32> to vector<64xf32>
    %29 = vector.shape_cast %28 : vector<64xf32> to vector<1x64xf32>
    %30 = vector.broadcast %9 : f32 to vector<1x64xf32>
    %31 = arith.mulf %29, %30 : vector<1x64xf32>
    %cst_9 = arith.constant 9.99999974E-6 : f32
    %32 = vector.broadcast %cst_9 : f32 to vector<1x64xf32>
    %33 = arith.addf %31, %32 : vector<1x64xf32>
    %34 = math.rsqrt %33 : vector<1x64xf32>
    %35 = vector.broadcast %34 : vector<1x64xf32> to vector<24x64xf32>
    %36 = arith.mulf %24, %35 : vector<24x64xf32>
    %cst_10 = arith.constant 0.000000e+00 : f32
    %37 = vector.broadcast %cst_10 : f32 to vector<24x64xf32>
    %38 = arith.maximumf %36, %37 : vector<24x64xf32>
    %39 = vector.broadcast %6 : vector<24x1xf32> to vector<24x64xf32>
    %40 = arith.mulf %38, %39 : vector<24x64xf32>
    %41 = arith.truncf %40 : vector<24x64xf32> to vector<24x64xbf16>
    %c0_11 = arith.constant 0 : index
    %c0_12 = arith.constant 0 : index
    %42 = vector.load %arg5[%c0_11, %c0_12] : memref<64x16xbf16, #tpu.memory_space<vmem>>, vector<64x16xbf16>
    %cst_13 = arith.constant dense<0.000000e+00> : vector<24x16xf32>
    %43 = tpu.matmul %41, %42, %cst_13 {dimension_numbers = #tpu.dot_dimension_numbers<[1], [0], [0], [1], [0, 0, 1, 1], [], []>} : vector<24x64xbf16>, vector<64x16xbf16>, vector<24x16xf32> -> vector<24x16xf32>
    %c0_14 = arith.constant 0 : index
    %c0_15 = arith.constant 0 : index
    %44 = vector.load %arg6[%c0_14, %c0_15] : memref<1x16xf32, #tpu.memory_space<vmem>>, vector<1x16xf32>
    %45 = vector.broadcast %44 : vector<1x16xf32> to vector<24x16xf32>
    %46 = arith.addf %43, %45 : vector<24x16xf32>
    %47 = vector.broadcast %6 : vector<24x1xf32> to vector<24x16xf32>
    %48 = arith.mulf %46, %47 : vector<24x16xf32>
    %cst_16 = arith.constant dense<0.000000e+00> : vector<16xf32>
    %49 = vector.multi_reduction <add>, %48, %cst_16 [0] : vector<24x16xf32> to vector<16xf32>
    %50 = vector.shape_cast %49 : vector<16xf32> to vector<1x16xf32>
    %51 = vector.broadcast %9 : f32 to vector<1x16xf32>
    %52 = arith.mulf %50, %51 : vector<1x16xf32>
    %53 = vector.broadcast %52 : vector<1x16xf32> to vector<24x16xf32>
    %54 = arith.subf %46, %53 : vector<24x16xf32>
    %55 = arith.mulf %54, %54 : vector<24x16xf32>
    %56 = vector.broadcast %6 : vector<24x1xf32> to vector<24x16xf32>
    %57 = arith.mulf %55, %56 : vector<24x16xf32>
    %cst_17 = arith.constant dense<0.000000e+00> : vector<16xf32>
    %58 = vector.multi_reduction <add>, %57, %cst_17 [0] : vector<24x16xf32> to vector<16xf32>
    %59 = vector.shape_cast %58 : vector<16xf32> to vector<1x16xf32>
    %60 = vector.broadcast %9 : f32 to vector<1x16xf32>
    %61 = arith.mulf %59, %60 : vector<1x16xf32>
    %cst_18 = arith.constant 9.99999974E-6 : f32
    %62 = vector.broadcast %cst_18 : f32 to vector<1x16xf32>
    %63 = arith.addf %61, %62 : vector<1x16xf32>
    %64 = math.rsqrt %63 : vector<1x16xf32>
    %65 = vector.broadcast %64 : vector<1x16xf32> to vector<24x16xf32>
    %66 = arith.mulf %54, %65 : vector<24x16xf32>
    %cst_19 = arith.constant 0.000000e+00 : f32
    %67 = vector.broadcast %cst_19 : f32 to vector<24x16xf32>
    %68 = arith.maximumf %66, %67 : vector<24x16xf32>
    %69 = vector.broadcast %6 : vector<24x1xf32> to vector<24x16xf32>
    %70 = arith.mulf %68, %69 : vector<24x16xf32>
    %c0_20 = arith.constant 0 : index
    %c0_21 = arith.constant 0 : index
    %71 = vector.load %arg7[%c0_20, %c0_21] : memref<1x16xf32, #tpu.memory_space<vmem>>, vector<1x16xf32>
    %72 = vector.broadcast %71 : vector<1x16xf32> to vector<24x16xf32>
    %73 = arith.mulf %70, %72 : vector<24x16xf32>
    %cst_22 = arith.constant dense<0.000000e+00> : vector<24xf32>
    %74 = vector.multi_reduction <add>, %73, %cst_22 [1] : vector<24x16xf32> to vector<24xf32>
    %75 = vector.shape_cast %74 : vector<24xf32> to vector<24x1xf32>
    %c0_23 = arith.constant 0 : index
    %c0_24 = arith.constant 0 : index
    %76 = vector.load %arg8[%c0_23, %c0_24] : memref<1x1xf32, #tpu.memory_space<vmem>>, vector<1x1xf32>
    %77 = vector.broadcast %76 : vector<1x1xf32> to vector<24x1xf32>
    %78 = arith.addf %75, %77 : vector<24x1xf32>
    %79 = arith.mulf %78, %6 : vector<24x1xf32>
    %c0_25 = arith.constant 0 : index
    %c0_26 = arith.constant 0 : index
    %c0_27 = arith.constant 0 : index
    %80 = vector.load %arg9[%c0_25, %c0_26, %c0_27] : memref<1x24x1xf32, #tpu.memory_space<vmem>>, vector<1x24x1xf32>
    %81 = vector.shape_cast %80 : vector<1x24x1xf32> to vector<24x1xf32>
    %82 = vector.shape_cast %79 : vector<24x1xf32> to vector<1x24x1xf32>
    tpu.vector_store %arg9[%c0_25, %c0_26, %c0_27], %82 {strides = array<i32>} : memref<1x24x1xf32, #tpu.memory_space<vmem>>, vector<1x24x1xf32>,
    return
  }
  func.func @transform_0(%arg0: i32, %arg1: memref<2xi32, #tpu.memory_space<smem>>) -> (i32, i32, i32) {
    %c0_i32 = arith.constant 0 : i32
    %c0_i32_0 = arith.constant 0 : i32
    %c0_i32_1 = arith.constant 0 : i32
    return %arg0, %c0_i32, %c0_i32_0 : i32, i32, i32
  }
  func.func @transform_1(%arg0: i32, %arg1: memref<2xi32, #tpu.memory_space<smem>>) -> (i32, i32) {
    %c0_i32 = arith.constant 0 : i32
    %c0_i32_0 = arith.constant 0 : i32
    %c0_i32_1 = arith.constant 0 : i32
    return %c0_i32, %c0_i32_0 : i32, i32
  }
  func.func @transform_2(%arg0: i32, %arg1: memref<2xi32, #tpu.memory_space<smem>>) -> (i32, i32) {
    %c0_i32 = arith.constant 0 : i32
    %c0_i32_0 = arith.constant 0 : i32
    %c0_i32_1 = arith.constant 0 : i32
    return %c0_i32, %c0_i32_0 : i32, i32
  }
  func.func @transform_3(%arg0: i32, %arg1: memref<2xi32, #tpu.memory_space<smem>>) -> (i32, i32) {
    %c0_i32 = arith.constant 0 : i32
    %c0_i32_0 = arith.constant 0 : i32
    %c0_i32_1 = arith.constant 0 : i32
    return %c0_i32, %c0_i32_0 : i32, i32
  }
  func.func @transform_4(%arg0: i32, %arg1: memref<2xi32, #tpu.memory_space<smem>>) -> (i32, i32) {
    %c0_i32 = arith.constant 0 : i32
    %c0_i32_0 = arith.constant 0 : i32
    %c0_i32_1 = arith.constant 0 : i32
    return %c0_i32, %c0_i32_0 : i32, i32
  }
  func.func @transform_5(%arg0: i32, %arg1: memref<2xi32, #tpu.memory_space<smem>>) -> (i32, i32) {
    %c0_i32 = arith.constant 0 : i32
    %c0_i32_0 = arith.constant 0 : i32
    %c0_i32_1 = arith.constant 0 : i32
    return %c0_i32, %c0_i32_0 : i32, i32
  }
  func.func @transform_6(%arg0: i32, %arg1: memref<2xi32, #tpu.memory_space<smem>>) -> (i32, i32) {
    %c0_i32 = arith.constant 0 : i32
    %c0_i32_0 = arith.constant 0 : i32
    %c0_i32_1 = arith.constant 0 : i32
    return %c0_i32, %c0_i32_0 : i32, i32
  }
  func.func @transform_7(%arg0: i32, %arg1: memref<2xi32, #tpu.memory_space<smem>>) -> (i32, i32, i32) {
    %c0_i32 = arith.constant 0 : i32
    %c0_i32_0 = arith.constant 0 : i32
    %c0_i32_1 = arith.constant 0 : i32
    return %arg0, %c0_i32, %c0_i32_0 : i32, i32, i32
  }
}

</mosaic_0001>

<llo_original>
// kernel: extractor_mlp_forward.1
$region0: #{extractor_mlp_forward.1}
  #allocation0 [shape = 'u32[]', space=smem, size = 0x4, offset = 0x4, fixed_abs, tag = 'smem constant byte address 0x4 - core index']
  #allocation1 [shape = 'u32[144,128]{1,0:T(1,128)}', space=vmem, size = 0x12000, scoped, tag = 'internal scratch']
  #allocation2 [shape = 's32[1]{0}', space=sflag, size = 0x4, scoped, tag = 'scoped memory for extractor_mlp_forward.1']
  #allocation3 [shape = 'u8[512]{0}', space=smem, size = 0x200, scoped, tag = 'prefetched SMEM operand 0']
  #allocation4 [shape = 'f32[1,1]{1,0:T(1,128)S(1)}', space=vmem, size = 0x200, scoped, tag = 'scoped memory for extractor_mlp_forward.1']
  %s0 = inlined_call_operand.vmem [shape: s32[2], index: 0, kind: input, shape index: {}]
  %s1 = inlined_call_operand.vmem [shape: bf16[2,24,32], index: 1, kind: input, shape index: {}]
  %s2 = inlined_call_operand.vmem [shape: bf16[32,64], index: 2, kind: input, shape index: {}]
  %s3 = inlined_call_operand.vmem [shape: f32[1,64], index: 3, kind: input, shape index: {}]
  %s4 = inlined_call_operand.vmem [shape: bf16[64,16], index: 4, kind: input, shape index: {}]
  %s5 = inlined_call_operand.vmem [shape: f32[1,16], index: 5, kind: input, shape index: {}]
  %s6 = inlined_call_operand.vmem [shape: f32[1,16], index: 6, kind: input, shape index: {}]
  %s7 = inlined_call_operand.<no memory space> [shape: f32[1,1], index: 7, kind: input, shape index: {}]
  %s8 = inlined_call_operand.vmem [shape: f32[2,24,1], index: 8, kind: output, shape index: {}]
  %s9 = sld [smem:[#allocation0]]
  $region61: #{extractor_mlp_forward.1} parent=0
    _
  %s11 = ssub.s32 1, %s9
  %s12 = scalar_select 0, %s11, %s9
  %s13 = sshll.u32 %s0, 4
  %s14 = int_to_ptr.vmem [resolvable:$true] %s13
  %16 = dma.vmem_to_smem %s14, 16, [#allocation3], [#allocation2]
  %v17 = vstv %s7
  %18 = vst [vmem:[#allocation4] sm:$0x1] %v17
  %19 = dma.done [#allocation2], 16
  %20 = sfence
  loop: start=0, step=1, limit=4
  $region2: #{extractor_mlp_forward.1} parent=0 // loop_pre_header
    _
  $region3: #{extractor_mlp_forward.1} parent=0 // loop_header
    %s22 = sphi 0, %s26
    %p23 = scmp.ge.s32.totalorder %s22, 4
    %s32 = sphi 0, %s34
    %s35 = sphi 0, %s32
    %s36 = sphi 0, %s35
    %s52 = sphi 0, %s36
    %s56 = sphi 0, %s56
    %s58 = sphi 0, %s56
    %s59 = sphi 0, %s58
    %s73 = sphi 0, %s59
    %s77 = sphi 0, %s77
    %s79 = sphi 0, %s77
    %s80 = sphi 0, %s79
    %s94 = sphi 0, %s80
    %s98 = sphi 0, %s98
    %s100 = sphi 0, %s98
    %s101 = sphi 0, %s100
    %s115 = sphi 0, %s101
    %s119 = sphi 0, %s119
    %s121 = sphi 0, %s119
    %s122 = sphi 0, %s121
    %s136 = sphi 0, %s122
    %s140 = sphi 0, %s140
    %s142 = sphi 0, %s140
    %s143 = sphi 0, %s142
    %s157 = sphi 0, %s143
    %s161 = sphi 0, %s161
    %s163 = sphi 0, %s161
    %s164 = sphi 0, %s163
    %s178 = sphi 0, %s164
    %s184 = sphi 0, %s186
    %s187 = sphi 0, %s184
    %s188 = sphi 0, %s187
    %s204 = sphi 0, %s188
  $region4: #{extractor_mlp_forward.1} parent=0 // loop_header_branch
    %25 = sbr.rel (%p23) target = $region8
  $region5: #{extractor_mlp_forward.1} parent=0 // loop_body
    %s27 = ssub.s32 %s22, 1
    %s28 = ssub.s32 %s22, 2
    %s29 = sadd.s32 %s22, 1
    %s30 = ssub.s32 %s22, %s29
    %p31 = scmp.eq.s32.totalorder %s30, 0
    %s33 = sadd.s32 %s32, 1
    %s34 = scalar_select %p31, %s32, %s33
    %p37 = pneg %p31
    %p38 = scmp.eq.s32.totalorder %s22, 1
    %p39 = por %p37, %p38
    %p40 = scmp.ne.s32.totalorder %s32, %s35
    %p41 = scmp.eq.s32.totalorder %s22, 0
    %p42 = por %p40, %p41
    %p43 = scmp.ne.s32.totalorder %s32, %s35
    %p44 = scmp.eq.s32.totalorder %s27, 1
    %p45 = por %p43, %p44
    %p46 = scmp.ne.s32.totalorder %s35, %s36
    %p47 = scmp.eq.s32.totalorder %s27, 0
    %p48 = por %p46, %p47
    %p49 = scmp.ne.s32.totalorder %s35, %s36
    %p50 = scmp.eq.s32.totalorder %s28, 1
    %p51 = por %p49, %p50
    %p53 = scmp.ne.s32.totalorder %s36, %s52
    %p54 = scmp.eq.s32.totalorder %s28, 0
    %p55 = por %p53, %p54
    %s57 = sadd.s32 %s56, 1
    %p60 = scmp.eq.s32.totalorder %s22, 1
    %p61 = scmp.ne.s32.totalorder %s56, %s58
    %p62 = scmp.eq.s32.totalorder %s22, 0
    %p63 = por %p61, %p62
    %p64 = scmp.ne.s32.totalorder %s56, %s58
    %p65 = scmp.eq.s32.totalorder %s27, 1
    %p66 = por %p64, %p65
    %p67 = scmp.ne.s32.totalorder %s58, %s59
    %p68 = scmp.eq.s32.totalorder %s27, 0
    %p69 = por %p67, %p68
    %p70 = scmp.ne.s32.totalorder %s58, %s59
    %p71 = scmp.eq.s32.totalorder %s28, 1
    %p72 = por %p70, %p71
    %p74 = scmp.ne.s32.totalorder %s59, %s73
    %p75 = scmp.eq.s32.totalorder %s28, 0
    %p76 = por %p74, %p75
    %s78 = sadd.s32 %s77, 1
    %p81 = scmp.eq.s32.totalorder %s22, 1
    %p82 = scmp.ne.s32.totalorder %s77, %s79
    %p83 = scmp.eq.s32.totalorder %s22, 0
    %p84 = por %p82, %p83
    %p85 = scmp.ne.s32.totalorder %s77, %s79
    %p86 = scmp.eq.s32.totalorder %s27, 1
    %p87 = por %p85, %p86
    %p88 = scmp.ne.s32.totalorder %s79, %s80
    %p89 = scmp.eq.s32.totalorder %s27, 0
    %p90 = por %p88, %p89
    %p91 = scmp.ne.s32.totalorder %s79, %s80
    %p92 = scmp.eq.s32.totalorder %s28, 1
    %p93 = por %p91, %p92
    %p95 = scmp.ne.s32.totalorder %s80, %s94
    %p96 = scmp.eq.s32.totalorder %s28, 0
    %p97 = por %p95, %p96
    %s99 = sadd.s32 %s98, 1
    %p102 = scmp.eq.s32.totalorder %s22, 1
    %p103 = scmp.ne.s32.totalorder %s98, %s100
    %p104 = scmp.eq.s32.totalorder %s22, 0
    %p105 = por %p103, %p104
    %p106 = scmp.ne.s32.totalorder %s98, %s100
    %p107 = scmp.eq.s32.totalorder %s27, 1
    %p108 = por %p106, %p107
    %p109 = scmp.ne.s32.totalorder %s100, %s101
    %p110 = scmp.eq.s32.totalorder %s27, 0
    %p111 = por %p109, %p110
    %p112 = scmp.ne.s32.totalorder %s100, %s101
    %p113 = scmp.eq.s32.totalorder %s28, 1
    %p114 = por %p112, %p113
    %p116 = scmp.ne.s32.totalorder %s101, %s115
    %p117 = scmp.eq.s32.totalorder %s28, 0
    %p118 = por %p116, %p117
    %s120 = sadd.s32 %s119, 1
    %p123 = scmp.eq.s32.totalorder %s22, 1
    %p124 = scmp.ne.s32.totalorder %s119, %s121
    %p125 = scmp.eq.s32.totalorder %s22, 0
    %p126 = por %p124, %p125
    %p127 = scmp.ne.s32.totalorder %s119, %s121
    %p128 = scmp.eq.s32.totalorder %s27, 1
    %p129 = por %p127, %p128
    %p130 = scmp.ne.s32.totalorder %s121, %s122
    %p131 = scmp.eq.s32.totalorder %s27, 0
    %p132 = por %p130, %p131
    %p133 = scmp.ne.s32.totalorder %s121, %s122
    %p134 = scmp.eq.s32.totalorder %s28, 1
    %p135 = por %p133, %p134
    %p137 = scmp.ne.s32.totalorder %s122, %s136
    %p138 = scmp.eq.s32.totalorder %s28, 0
    %p139 = por %p137, %p138
    %s141 = sadd.s32 %s140, 1
    %p144 = scmp.eq.s32.totalorder %s22, 1
    %p145 = scmp.ne.s32.totalorder %s140, %s142
    %p146 = scmp.eq.s32.totalorder %s22, 0
    %p147 = por %p145, %p146
    %p148 = scmp.ne.s32.totalorder %s140, %s142
    %p149 = scmp.eq.s32.totalorder %s27, 1
    %p150 = por %p148, %p149
    %p151 = scmp.ne.s32.totalorder %s142, %s143
    %p152 = scmp.eq.s32.totalorder %s27, 0
    %p153 = por %p151, %p152
    %p154 = scmp.ne.s32.totalorder %s142, %s143
    %p155 = scmp.eq.s32.totalorder %s28, 1
    %p156 = por %p154, %p155
    %p158 = scmp.ne.s32.totalorder %s143, %s157
    %p159 = scmp.eq.s32.totalorder %s28, 0
    %p160 = por %p158, %p159
    %s162 = sadd.s32 %s161, 1
    %p165 = scmp.eq.s32.totalorder %s22, 1
    %p166 = scmp.ne.s32.totalorder %s161, %s163
    %p167 = scmp.eq.s32.totalorder %s22, 0
    %p168 = por %p166, %p167
    %p169 = scmp.ne.s32.totalorder %s161, %s163
    %p170 = scmp.eq.s32.totalorder %s27, 1
    %p171 = por %p169, %p170
    %p172 = scmp.ne.s32.totalorder %s163, %s164
    %p173 = scmp.eq.s32.totalorder %s27, 0
    %p174 = por %p172, %p173
    %p175 = scmp.ne.s32.totalorder %s163, %s164
    %p176 = scmp.eq.s32.totalorder %s28, 1
    %p177 = por %p175, %p176
    %p179 = scmp.ne.s32.totalorder %s164, %s178
    %p180 = scmp.eq.s32.totalorder %s28, 0
    %p181 = por %p179, %p180
    %s182 = ssub.s32 %s22, %s29
    %p183 = scmp.eq.s32.totalorder %s182, 0
    %s185 = sadd.s32 %s184, 1
    %s186 = scalar_select %p183, %s184, %s185
    %p189 = pneg %p183
    %p190 = scmp.eq.s32.totalorder %s22, 1
    %p191 = por %p189, %p190
    %p192 = scmp.ne.s32.totalorder %s184, %s187
    %p193 = scmp.eq.s32.totalorder %s22, 0
    %p194 = por %p192, %p193
    %p195 = scmp.ne.s32.totalorder %s184, %s187
    %p196 = scmp.eq.s32.totalorder %s27, 1
    %p197 = por %p195, %p196
    %p198 = scmp.ne.s32.totalorder %s187, %s188
    %p199 = scmp.eq.s32.totalorder %s27, 0
    %p200 = por %p198, %p199
    %p201 = scmp.ne.s32.totalorder %s187, %s188
    %p202 = scmp.eq.s32.totalorder %s28, 1
    %p203 = por %p201, %p202
    %p205 = scmp.ne.s32.totalorder %s188, %s204
    %p206 = scmp.eq.s32.totalorder %s28, 0
    %p207 = por %p205, %p206
    %p208 = scmp.le.s32.totalorder 1, %s22
    %p209 = scmp.lt.s32.totalorder %s22, 3
    %p210 = pnand %p208, %p209
    %p211 = pneg %p210
    // Predicated region
    $region9: #{extractor_mlp_forward.1} parent=5 // pred_check
      _
    $region10: #{extractor_mlp_forward.1} parent=5 // pred_check_branch
      %213 = sbr.rel (%p210) target = $region12
    $region11: #{extractor_mlp_forward.1} parent=5 // pred_region
      %s214 = ssub.s32 %s22, 1
      // Predicated region
      $region13: #{extractor_mlp_forward.1} parent=11 // pred_check
        %p215 = pneg %p69
      $region14: #{extractor_mlp_forward.1} parent=11 // pred_check_branch
        %217 = sbr.rel (%p215) target = $region16
      $region15: #{extractor_mlp_forward.1} parent=11 // pred_region
        _
      $region16: #{extractor_mlp_forward.1} parent=11 // pred_fallthru
        _
      // Predicated region
      $region17: #{extractor_mlp_forward.1} parent=11 // pred_check
        %p218 = pneg %p90
      $region18: #{extractor_mlp_forward.1} parent=11 // pred_check_branch
        %220 = sbr.rel (%p218) target = $region20
      $region19: #{extractor_mlp_forward.1} parent=11 // pred_region
        _
      $region20: #{extractor_mlp_forward.1} parent=11 // pred_fallthru
        _
      // Predicated region
      $region21: #{extractor_mlp_forward.1} parent=11 // pred_check
        %p221 = pneg %p111
      $region22: #{extractor_mlp_forward.1} parent=11 // pred_check_branch
        %223 = sbr.rel (%p221) target = $region24
      $region23: #{extractor_mlp_forward.1} parent=11 // pred_region
        _
      $region24: #{extractor_mlp_forward.1} parent=11 // pred_fallthru
        _
      // Predicated region
      $region25: #{extractor_mlp_forward.1} parent=11 // pred_check
        %p224 = pneg %p132
      $region26: #{extractor_mlp_forward.1} parent=11 // pred_check_branch
        %226 = sbr.rel (%p224) target = $region28
      $region27: #{extractor_mlp_forward.1} parent=11 // pred_region
        _
      $region28: #{extractor_mlp_forward.1} parent=11 // pred_fallthru
        _
      // Predicated region
      $region29: #{extractor_mlp_forward.1} parent=11 // pred_check
        %p227 = pneg %p153
      $region30: #{extractor_mlp_forward.1} parent=11 // pred_check_branch
        %229 = sbr.rel (%p227) target = $region32
      $region31: #{extractor_mlp_forward.1} parent=11 // pred_region
        _
      $region32: #{extractor_mlp_forward.1} parent=11 // pred_fallthru
        _
      // Predicated region
      $region33: #{extractor_mlp_forward.1} parent=11 // pred_check
        %p230 = pneg %p174
      $region34: #{extractor_mlp_forward.1} parent=11 // pred_check_branch
        %232 = sbr.rel (%p230) target = $region36
      $region35: #{extractor_mlp_forward.1} parent=11 // pred_region
        _
      $region36: #{extractor_mlp_forward.1} parent=11 // pred_fallthru
        _
    $region12: #{extractor_mlp_forward.1} parent=5 // pred_fallthru
      _
    %p233 = scmp.lt.s32.totalorder %s22, 2
    // Predicated region
    $region37: #{extractor_mlp_forward.1} parent=5 // pred_check
      %p234 = pneg %p233
    $region38: #{extractor_mlp_forward.1} parent=5 // pred_check_branch
      %236 = sbr.rel (%p234) target = $region40
    $region39: #{extractor_mlp_forward.1} parent=5 // pred_region
      // Predicated region
      $region41: #{extractor_mlp_forward.1} parent=39 // pred_check
        %p237 = pneg %p42
      $region42: #{extractor_mlp_forward.1} parent=39 // pred_check_branch
        %239 = sbr.rel (%p237) target = $region44
      $region43: #{extractor_mlp_forward.1} parent=39 // pred_region
        %p240 = scmp.lt.s32.totalorder %s22, 1
        %s241 = scalar_select %p240, %s22, 1
        %s242 = smul.addr %s241, 3
        %s243 = smul.addr %s242, 4
        %s244 = scalar_lea.vmem %s1, %s243
      $region44: #{extractor_mlp_forward.1} parent=39 // pred_fallthru
        _
    $region40: #{extractor_mlp_forward.1} parent=5 // pred_fallthru
      _
    %p245 = scmp.le.s32.totalorder 1, %s22
    %p246 = scmp.lt.s32.totalorder %s22, 3
    %p247 = pnand %p245, %p246
    %p248 = pneg %p247
    // Predicated region
    $region45: #{extractor_mlp_forward.1} parent=5 // pred_check
      _
    $region46: #{extractor_mlp_forward.1} parent=5 // pred_check_branch
      %250 = sbr.rel (%p247) target = $region48
    $region47: #{extractor_mlp_forward.1} parent=5 // pred_region
      %s251 = ssub.s32 %s22, 1
      %p252 = scmp.lt.s32.totalorder %s27, 1
      %s253 = scalar_select %p252, %s27, 1
      %s254 = smul.addr %s253, 3
      %s255 = smul.addr %s254, 4
      %s256 = scalar_lea.vmem %s1, %s255
      %p257 = pneg %p48
      %p258 = pneg %p45
      %p259 = pneg %p69
      %p260 = pneg %p66
      %p261 = pneg %p90
      %p262 = pneg %p87
      %p263 = pneg %p111
      %p264 = pneg %p108
      %p265 = pneg %p132
      %p266 = pneg %p129
      %p267 = pneg %p153
      %p268 = pneg %p150
      %p269 = pneg %p174
      %p270 = pneg %p171
      %p271 = pneg %p200
      %p272 = pneg %p197
      %p273 = scmp.lt.s32.totalorder %s27, 1
      %s274 = scalar_select %p273, %s27, 1
      %s275 = smul.addr %s274, 3
      %s276 = smul.addr %s275, 8
      %s277 = scalar_lea.vmem %s8, %s276
      %p278 = scmp.lt.s32.totalorder %s27, 1
      %s279 = scalar_select %p278, %s27, 1
      %s280 = smul.addr %s279, 3
      %s281 = smul.addr %s280, 4
      %s282 = scalar_lea.vmem %s1, %s281
      %p283 = scmp.lt.s32.totalorder %s27, 1
      %s284 = scalar_select %p283, %s27, 1
      %s285 = smul.addr %s284, 3
      %s286 = smul.addr %s285, 8
      %s287 = scalar_lea.vmem %s8, %s286
      %s289 = sld [smem:[#allocation3 + %s27]]
      %v290 = vlaneseq
      %v291 = vshrl.u32 %v290, 7
      %v292 = vadd.s32 %v291, 8
      %v293 = vadd.s32 %v291, 16
      %v294 = vstv %s289
      %vm295 = vcmp.lt.s32.totalorder %v291, %v294
      %vm296 = vcmp.lt.s32.totalorder %v292, %v294
      %vm297 = vcmp.lt.s32.totalorder %v293, %v294
      %v298 = vsel %vm295, 1, 0
      %v299 = vsel %vm296, 1, 0
      %v300 = vsel %vm297, 1, 0
      %v301 = vcvt.s32.f32 %v298
      %v302 = vcvt.s32.f32 %v299
      %v303 = vcvt.s32.f32 %v300
      %p304 = scmp.gt.s32.totalorder %s289, 1
      %s305 = scalar_select %p304, %s289, 1
      %s306 = scvt.s32.f32 %s305
      %v307 = vstv %s306
      %v308 = vrcp.pop %v307
      %s309 = vtos %v308
      %v310 = vld [vmem:[%s282] sm:$0xf]
      %v311 = vld [vmem:[%s282 + $0x4] sm:$0xf]
      %v312 = vld [vmem:[%s282 + $0x8] sm:$0xf]
      %v313 = vld [vmem:[%s2] sm:$0xf]
      %v314 = vld [vmem:[%s2 + $0x4] sm:$0xf]
      %v315 = vld [vmem:[%s2 + $0x8] sm:$0xf]
      %v316 = vld [vmem:[%s2 + $0xc] sm:$0xf]
      %v317 = vld [vmem:[%s3] sm:$0x1]
      %v319 = vlaneseq
      %v320 = vshrl.u32 %v319, 7
      %v321 = vsub.s32 0, %v320
      %v322 = vrot.slane %v317, %v321
      %v327 = vunpack.c.l.b16 %v310
      %v328 = vunpack.c.l.b16 %v311
      %v329 = vunpack.c.l.b16 %v312
      %v330 = vpack.c.b16 %v328, %v327
      %v331 = vpack.c.b16 %v329, %v329
      %v336 = vunpack.c.l.b16 %v313
      %v337 = vunpack.c.l.b16 %v314
      %v338 = vunpack.c.l.b16 %v315
      %v339 = vunpack.c.l.b16 %v316
      %v340 = vpack.c.b16 %v337, %v336
      %v341 = vpack.c.b16 %v339, %v338
      %vm344 = vcmask 261120
      %v346 = vsel %vm344, %v330, 0
      %v349 = vsel %vm344, %v331, 0
      %351 = vmatprep.subr.bf16.mxu0 0
      %352 = vmatpush1.bf16.msra.mxu0 0
      %353 = vmatprep.subr.bf16.mxu0 0
      %354 = vmatpush1.bf16.msra.mxu0 0
      %355 = vmatprep.subr.bf16.mxu0 0
      %356 = vmatpush1.bf16.msra.mxu0 0
      %357 = vmatprep.subr.bf16.mxu0 0
      %358 = vmatpush1.bf16.msra.mxu0 0
      %359 = vmatprep.subr.bf16.mxu0 0
      %360 = vmatpush1.bf16.msra.mxu0 0
      %361 = vmatprep.subr.bf16.mxu0 0
      %362 = vmatpush1.bf16.msra.mxu0 0
      %363 = vmatprep.subr.bf16.mxu0 0
      %364 = vmatpush1.bf16.msra.mxu0 %v341
      %365 = vmatprep.subr.bf16.mxu0 0
      %366 = vmatpush1.bf16.msra.mxu0 %v340
      %367 = vmatprep.subr.bf16.mxu0 0
      %368 = vmatpush2.bf16.msra.mxu0 0
      %369 = vmatprep.subr.bf16.mxu0 0
      %370 = vmatpush2.bf16.msra.mxu0 0
      %371 = vmatprep.subr.bf16.mxu0 0
      %372 = vmatpush2.bf16.msra.mxu0 0
      %373 = vmatprep.subr.bf16.mxu0 0
      %374 = vmatpush2.bf16.msra.mxu0 0
      %375 = vmatprep.subr.bf16.mxu0 0
      %376 = vmatpush2.bf16.msra.mxu0 0
      %377 = vmatprep.subr.bf16.mxu0 0
      %378 = vmatpush2.bf16.msra.mxu0 0
      %379 = vmatprep.subr.bf16.mxu0 0
      %380 = vmatpush2.bf16.msra.mxu0 0
      %381 = vmatprep.subr.bf16.mxu0 0
      %382 = vmatpush2.bf16.msra.mxu0 0
      %383 = vmatprep.mubr.bf16.mxu0 0
      %384 = vmatmul.mubr.bf16.gmra.mxu0 %v346
      %v385 = vpop.f32.mrf.mxu0
      %v386 = vadd.f32 %v322, %v385
      %v387 = vpop.f32.mrf.mxu0
      %v388 = vpop.f32.mrf.mxu0
      %v389 = vadd.f32 %v322, %v388
      %v390 = vpop.f32.mrf.mxu0
      %391 = vmatprep.mubr.bf16.mxu0 0
      %392 = vmatmul.mubr.bf16.gmra.mxu0 %v349
      %v393 = vpop.f32.mrf.mxu0
      %v394 = vadd.f32 %v322, %v393
      %v395 = vpop.f32.mrf.mxu0
      %v396 = vpop.f32.mrf.mxu0
      %v397 = vpop.f32.mrf.mxu0
      %398 = vdwg.mxu0
      %v399 = vmul.f32 %v386, %v301
      %v400 = vmul.f32 %v389, %v302
      %v401 = vmul.f32 %v394, %v303
      %vm402 = vcmask 523264
      %v403 = vsel %vm402, %v399, 0.0
      %v404 = vsel %vm402, %v400, 0.0
      %v405 = vadd.f32 %v403, %v404
      %v406 = vsel %vm402, %v401, 0.0
      %v407 = vadd.f32 %v405, %v406
      %v408 = vrot.slane %v407, 4
      %v409 = vadd.f32 %v407, %v408
      %v410 = vrot.slane %v409, 2
      %v411 = vadd.f32 %v409, %v410
      %v412 = vrot.slane %v411, 1
      %v413 = vadd.f32 %v411, %v412
      %v414 = vstv %s309
      %v415 = vmul.f32 %v413, %v414
      %v416 = vsub.f32 %v386, %v415
      %v417 = vsub.f32 %v389, %v415
      %v418 = vsub.f32 %v394, %v415
      %v419 = vmul.f32 %v416, %v416
      %v420 = vmul.f32 %v417, %v417
      %v421 = vmul.f32 %v418, %v418
      %v422 = vmul.f32 %v419, %v301
      %v423 = vmul.f32 %v420, %v302
      %v424 = vmul.f32 %v421, %v303
      %v425 = vsel %vm402, %v422, 0.0
      %v426 = vsel %vm402, %v423, 0.0
      %v427 = vadd.f32 %v425, %v426
      %v428 = vsel %vm402, %v424, 0.0
      %v429 = vadd.f32 %v427, %v428
      %v430 = vrot.slane %v429, 4
      %v431 = vadd.f32 %v429, %v430
      %v432 = vrot.slane %v431, 2
      %v433 = vadd.f32 %v431, %v432
      %v434 = vrot.slane %v433, 1
      %v435 = vadd.f32 %v433, %v434
      %v436 = vmul.f32 %v435, %v414
      %v437 = vadd.f32 %v436, 1e-05
      %v438 = vrsqrt.pop %v437
      %v439 = vmul.f32 %v416, %v438
      %v440 = vmul.f32 %v417, %v438
      %v441 = vmul.f32 %v418, %v438
      %v442 = vmax.f32 %v439, 0.0
      %v443 = vmax.f32 %v440, 0.0
      %v444 = vmax.f32 %v441, 0.0
      %v445 = vmul.f32 %v442, %v301
      %v446 = vmul.f32 %v443, %v302
      %v447 = vmul.f32 %v444, %v303
      %v448 = vpack.c.bf16 %v446, %v445
      %v449 = vpack.c.bf16 %v447, %v447
      %v450 = vld [vmem:[%s4] sm:$0xf]
      %v451 = vld [vmem:[%s4 + $0x4] sm:$0xf]
      %v452 = vld [vmem:[%s4 + $0x8] sm:$0xf]
      %v453 = vld [vmem:[%s4 + $0xc] sm:$0xf]
      %v454 = vld [vmem:[%s4 + $0x10] sm:$0xf]
      %v455 = vld [vmem:[%s4 + $0x14] sm:$0xf]
      %v456 = vld [vmem:[%s4 + $0x18] sm:$0xf]
      %v457 = vld [vmem:[%s4 + $0x1c] sm:$0xf]
      %v458 = vld [vmem:[%s5] sm:$0x1]
      %v460 = vlaneseq
      %v461 = vshrl.u32 %v460, 7
      %v462 = vsub.s32 0, %v461
      %v463 = vrot.slane %v458, %v462
      %v473 = vunpack.c.l.b16 %v450
      %v474 = vunpack.c.l.b16 %v451
      %v475 = vunpack.c.l.b16 %v452
      %v476 = vunpack.c.l.b16 %v453
      %v477 = vunpack.c.l.b16 %v454
      %v478 = vunpack.c.l.b16 %v455
      %v479 = vunpack.c.l.b16 %v456
      %v480 = vunpack.c.l.b16 %v457
      %v481 = vpack.c.b16 %v474, %v473
      %v482 = vpack.c.b16 %v476, %v475
      %v483 = vpack.c.b16 %v478, %v477
      %v484 = vpack.c.b16 %v480, %v479
      %v490 = vsel %vm402, %v448, 0
      %v493 = vsel %vm402, %v449, 0
      %495 = vmatprep.subr.bf16.mxu0 0
      %496 = vmatpush1.bf16.msra.mxu0 0
      %497 = vmatprep.subr.bf16.mxu0 0
      %498 = vmatpush1.bf16.msra.mxu0 0
      %499 = vmatprep.subr.bf16.mxu0 0
      %500 = vmatpush1.bf16.msra.mxu0 0
      %501 = vmatprep.subr.bf16.mxu0 0
      %502 = vmatpush1.bf16.msra.mxu0 0
      %503 = vmatprep.subr.bf16.mxu0 0
      %504 = vmatpush1.bf16.msra.mxu0 %v484
      %505 = vmatprep.subr.bf16.mxu0 0
      %506 = vmatpush1.bf16.msra.mxu0 %v483
      %507 = vmatprep.subr.bf16.mxu0 0
      %508 = vmatpush1.bf16.msra.mxu0 %v482
      %509 = vmatprep.subr.bf16.mxu0 0
      %510 = vmatpush1.bf16.msra.mxu0 %v481
      %511 = vmatprep.subr.bf16.mxu0 0
      %512 = vmatpush2.bf16.msra.mxu0 0
      %513 = vmatprep.subr.bf16.mxu0 0
      %514 = vmatpush2.bf16.msra.mxu0 0
      %515 = vmatprep.subr.bf16.mxu0 0
      %516 = vmatpush2.bf16.msra.mxu0 0
      %517 = vmatprep.subr.bf16.mxu0 0
      %518 = vmatpush2.bf16.msra.mxu0 0
      %519 = vmatprep.subr.bf16.mxu0 0
      %520 = vmatpush2.bf16.msra.mxu0 0
      %521 = vmatprep.subr.bf16.mxu0 0
      %522 = vmatpush2.bf16.msra.mxu0 0
      %523 = vmatprep.subr.bf16.mxu0 0
      %524 = vmatpush2.bf16.msra.mxu0 0
      %525 = vmatprep.subr.bf16.mxu0 0
      %526 = vmatpush2.bf16.msra.mxu0 0
      %527 = vmatprep.mubr.bf16.mxu0 0
      %528 = vmatmul.mubr.bf16.gmra.mxu0 %v490
      %v529 = vpop.f32.mrf.mxu0
      %v530 = vadd.f32 %v463, %v529
      %v531 = vpop.f32.mrf.mxu0
      %v532 = vpop.f32.mrf.mxu0
      %v533 = vadd.f32 %v463, %v532
      %v534 = vpop.f32.mrf.mxu0
      %535 = vmatprep.mubr.bf16.mxu0 0
      %536 = vmatmul.mubr.bf16.gmra.mxu0 %v493
      %v537 = vpop.f32.mrf.mxu0
      %v538 = vadd.f32 %v463, %v537
      %v539 = vpop.f32.mrf.mxu0
      %v540 = vpop.f32.mrf.mxu0
      %v541 = vpop.f32.mrf.mxu0
      %542 = vdwg.mxu0
      %v543 = vmul.f32 %v530, %v301
      %v544 = vmul.f32 %v533, %v302
      %v545 = vmul.f32 %v538, %v303
      %vm546 = vcmask 130048
      %v547 = vsel %vm546, %v543, 0.0
      %v548 = vsel %vm546, %v544, 0.0
      %v549 = vadd.f32 %v547, %v548
      %v550 = vsel %vm546, %v545, 0.0
      %v551 = vadd.f32 %v549, %v550
      %v552 = vrot.slane %v551, 4
      %v553 = vadd.f32 %v551, %v552
      %v554 = vrot.slane %v553, 2
      %v555 = vadd.f32 %v553, %v554
      %v556 = vrot.slane %v555, 1
      %v557 = vadd.f32 %v555, %v556
      %v558 = vmul.f32 %v557, %v414
      %v559 = vsub.f32 %v530, %v558
      %v560 = vsub.f32 %v533, %v558
      %v561 = vsub.f32 %v538, %v558
      %v562 = vmul.f32 %v559, %v559
      %v563 = vmul.f32 %v560, %v560
      %v564 = vmul.f32 %v561, %v561
      %v565 = vmul.f32 %v562, %v301
      %v566 = vmul.f32 %v563, %v302
      %v567 = vmul.f32 %v564, %v303
      %v568 = vsel %vm546, %v565, 0.0
      %v569 = vsel %vm546, %v566, 0.0
      %v570 = vadd.f32 %v568, %v569
      %v571 = vsel %vm546, %v567, 0.0
      %v572 = vadd.f32 %v570, %v571
      %v573 = vrot.slane %v572, 4
      %v574 = vadd.f32 %v572, %v573
      %v575 = vrot.slane %v574, 2
      %v576 = vadd.f32 %v574, %v575
      %v577 = vrot.slane %v576, 1
      %v578 = vadd.f32 %v576, %v577
      %v579 = vmul.f32 %v578, %v414
      %v580 = vadd.f32 %v579, 1e-05
      %v581 = vrsqrt.pop %v580
      %v582 = vmul.f32 %v559, %v581
      %v583 = vmul.f32 %v560, %v581
      %v584 = vmul.f32 %v561, %v581
      %v585 = vmax.f32 %v582, 0.0
      %v586 = vmax.f32 %v583, 0.0
      %v587 = vmax.f32 %v584, 0.0
      %v588 = vmul.f32 %v585, %v301
      %v589 = vmul.f32 %v586, %v302
      %v590 = vmul.f32 %v587, %v303
      %v591 = vld [vmem:[%s6] sm:$0x1]
      %v593 = vlaneseq
      %v594 = vshrl.u32 %v593, 7
      %v595 = vsub.s32 0, %v594
      %v596 = vrot.slane %v591, %v595
      %v598 = vmul.f32 %v588, %v596
      %v599 = vmul.f32 %v589, %v596
      %v600 = vmul.f32 %v590, %v596
      %v601 = vsel %vm546, %v598, 0.0
      %602 = vadd.xlane.f32.xlu0 %v601
      %v603 = vpop.xlane.xlu0 %602
      %v604 = vsel %vm546, %v599, 0.0
      %605 = vadd.xlane.f32.xlu0 %v604
      %v606 = vpop.xlane.xlu0 %605
      %v607 = vsel %vm546, %v600, 0.0
      %608 = vadd.xlane.f32.xlu0 %v607
      %v609 = vpop.xlane.xlu0 %608
      %v610 = vld [vmem:[#allocation4] sm:$0x1]
      %v612 = vlaneseq
      %v613 = vshrl.u32 %v612, 7
      %v614 = vsub.s32 0, %v613
      %v615 = vrot.slane %v610, %v614
      %v617 = vadd.f32 %v603, %v615
      %v618 = vadd.f32 %v606, %v615
      %v619 = vadd.f32 %v609, %v615
      %v620 = vmul.f32 %v617, %v301
      %v621 = vmul.f32 %v618, %v302
      %v622 = vmul.f32 %v619, %v303
      %vm623 = vcmask 7168
      %624 = vst.msk [vmem:[%s287] sm:$0xff] %vm623, %v620
      %625 = vst.msk [vmem:[%s287 + $0x8] sm:$0xff] %vm623, %v621
      %626 = vst.msk [vmem:[%s287 + $0x10] sm:$0xff] %vm623, %v622
      %p627 = scmp.lt.s32.totalorder %s27, 1
      %s628 = scalar_select %p627, %s27, 1
      %s629 = smul.addr %s628, 3
      %s630 = smul.addr %s629, 8
      %s631 = scalar_lea.vmem %s8, %s630
      // Predicated region
      $region49: #{extractor_mlp_forward.1} parent=47 // pred_check
        %p632 = pneg %p197
      $region50: #{extractor_mlp_forward.1} parent=47 // pred_check_branch
        %634 = sbr.rel (%p632) target = $region52
      $region51: #{extractor_mlp_forward.1} parent=47 // pred_region
        _
      $region52: #{extractor_mlp_forward.1} parent=47 // pred_fallthru
        _
    $region48: #{extractor_mlp_forward.1} parent=5 // pred_fallthru
      _
    %p635 = scmp.le.s32.totalorder 2, %s22
    // Predicated region
    $region53: #{extractor_mlp_forward.1} parent=5 // pred_check
      %p636 = pneg %p635
    $region54: #{extractor_mlp_forward.1} parent=5 // pred_check_branch
      %638 = sbr.rel (%p636) target = $region56
    $region55: #{extractor_mlp_forward.1} parent=5 // pred_region
      %s639 = ssub.s32 %s22, 2
      // Predicated region
      $region57: #{extractor_mlp_forward.1} parent=55 // pred_check
        %p640 = pneg %p203
      $region58: #{extractor_mlp_forward.1} parent=55 // pred_check_branch
        %642 = sbr.rel (%p640) target = $region60
      $region59: #{extractor_mlp_forward.1} parent=55 // pred_region
        %p643 = scmp.lt.s32.totalorder %s28, 1
        %s644 = scalar_select %p643, %s28, 1
        %s645 = smul.addr %s644, 3
        %s646 = smul.addr %s645, 8
        %s647 = scalar_lea.vmem %s8, %s646
      $region60: #{extractor_mlp_forward.1} parent=55 // pred_fallthru
        _
    $region56: #{extractor_mlp_forward.1} parent=5 // pred_fallthru
      _
  $region6: #{extractor_mlp_forward.1} parent=0 // loop_footer
    %s26 = sadd.s32 1, %s22
  $region7: #{extractor_mlp_forward.1} parent=0 // loop_footer_branch
    %21 = sbr.rel target = $region3
  $region8: #{extractor_mlp_forward.1} parent=0 // loop_exit
    _

</llo_original>
